<compile_context>
chip_gen: v7x
topology: tpu7x:2x2x1
jax: 0.10.0
libtpu: 0.0.40
codegen_flags: <defaults>
</compile_context>

<pallas_src>
import jax
import jax.numpy as jnp
from jax.experimental import pallas as pl
from jax.experimental.pallas import tpu as pltpu

IN_FEATURES = 576
HIDDEN = 256
NUM_CLASSES = 80
PADDED_CLASSES = 128      # lane-dense class dim (80 -> 128)
BN_EPS = 1e-5
NEG_MASK = -1e30          # bias for padded class lanes -> exp() == 0


def omni_classifier_kernel(x_ref, w1_ref, params_ref, w2_ref, o_ref):
    # x_ref: (B, 576) f32 | w1_ref: (576, 256) bf16 | w2_ref: (256, 128) bf16
    # params_ref: (4, 256) f32 rows = [b1, gamma, beta, b2 (lanes 80..127 = -1e30)]
    params = params_ref[...]
    b1 = params[0:1, :]                        # (1, 256)
    gamma = params[1:2, :]                     # (1, 256)
    beta = params[2:3, :]                      # (1, 256)
    b2 = params[3:4, :PADDED_CLASSES]          # (1, 128), first lane tile of row 3

    # Linear(576 -> 256): bf16 operands on the MXU, f32 accumulation.
    h = jnp.dot(x_ref[...].astype(jnp.bfloat16), w1_ref[...],
                preferred_element_type=jnp.float32) + b1          # (B, 256) f32

    # BatchNorm1d(256) in training mode: biased batch variance (two-pass form),
    # fused with the affine transform and ReLU.
    mean = jnp.mean(h, axis=0, keepdims=True)                     # (1, 256)
    centered = h - mean
    var = jnp.mean(centered * centered, axis=0, keepdims=True)    # (1, 256)
    scale = gamma * jax.lax.rsqrt(var + BN_EPS)                   # (1, 256)
    h = jnp.maximum(centered * scale + beta, 0.0)                 # BN + ReLU

    # Linear(256 -> 128-padded): padded lanes get a -1e30 bias.
    logits = jnp.dot(h.astype(jnp.bfloat16), w2_ref[...],
                     preferred_element_type=jnp.float32) + b2     # (B, 128)

    # Softmax over dim=1; padded lanes underflow to exactly 0 after exp().
    m = jnp.max(logits, axis=1, keepdims=True)
    e = jnp.exp(logits - m)
    o_ref[...] = e / jnp.sum(e, axis=1, keepdims=True)            # exact: rows sum to 1


def prepare_omni_params(w1, b1, gamma, beta, w2, b2):
    """One-time (per weight set) preprocessing. Keep the results as persistent
    device arrays and reuse them across calls — do NOT redo this per call."""
    w1_bf16 = w1.astype(jnp.bfloat16)                             # (576, 256)

    w2_pad = jnp.zeros((HIDDEN, PADDED_CLASSES), jnp.bfloat16)    # (256, 128)
    w2_pad = w2_pad.at[:, :NUM_CLASSES].set(w2.astype(jnp.bfloat16))

    b2_row = jnp.full((HIDDEN,), 0.0, jnp.float32)
    b2_row = b2_row.at[:NUM_CLASSES].set(b2.reshape(-1).astype(jnp.float32))
    b2_row = b2_row.at[NUM_CLASSES:PADDED_CLASSES].set(NEG_MASK)

    params = jnp.zeros((4, HIDDEN), jnp.float32)                  # (4, 256)
    params = params.at[0, :].set(b1.reshape(-1).astype(jnp.float32))
    params = params.at[1, :].set(gamma.reshape(-1).astype(jnp.float32))
    params = params.at[2, :].set(beta.reshape(-1).astype(jnp.float32))
    params = params.at[3, :].set(b2_row)
    return w1_bf16, params, w2_pad


@jax.jit
def omni_classifier_apply(x, w1_bf16, params, w2_pad):
    """Hot path: single gridless pallas_call + a tiny [:, :80] slice."""
    B = x.shape[0]

    def vmem_spec():
        return pl.BlockSpec(memory_space=pltpu.MemorySpace.VMEM)

    out = pl.pallas_call(
        omni_classifier_kernel,
        out_shape=jax.ShapeDtypeStruct((B, PADDED_CLASSES), jnp.float32),
        in_specs=[vmem_spec(), vmem_spec(), vmem_spec(), vmem_spec()],
        out_specs=vmem_spec(),
    )(x, w1_bf16, params, w2_pad)
    return out[:, :NUM_CLASSES]


def omni_classifier(x, w1, b1, gamma, beta, w2, b2):
    """Convenience wrapper (prep + apply). For repeated inference, call
    prepare_omni_params() once and omni_classifier_apply() per batch."""
    prepped = prepare_omni_params(w1, b1, gamma, beta, w2, b2)
    return omni_classifier_apply(x, *prepped)


def reference(x, w1, b1, gamma, beta, w2, b2):
    """Pure-f32 JAX reference matching the PyTorch module (train-mode BN)."""
    h = x @ w1 + b1
    mean = jnp.mean(h, axis=0, keepdims=True)
    var = jnp.mean((h - mean) ** 2, axis=0, keepdims=True)
    h = (h - mean) / jnp.sqrt(var + BN_EPS)
    h = h * gamma + beta
    h = jnp.maximum(h, 0.0)
    logits = h @ w2 + b2
    return jax.nn.softmax(logits, axis=1)


if __name__ == "__main__":
    key = jax.random.PRNGKey(0)
    kx, k1, k2, k3, k4 = jax.random.split(key, 5)

    B = 8  # small batch; BatchNorm1d needs B > 1 in train mode
    x = jax.random.normal(kx, (B, IN_FEATURES), dtype=jnp.float32)

    # Deterministic synthetic parameters.
    # Linear weights stored as (in, out) = transpose of PyTorch's (out, in).
    w1 = jax.random.normal(k1, (IN_FEATURES, HIDDEN), dtype=jnp.float32) * 0.05
    b1 = jax.random.normal(k2, (1, HIDDEN), dtype=jnp.float32) * 0.05
    gamma = jnp.ones((1, HIDDEN), dtype=jnp.float32)   # BatchNorm1d default weight
    beta = jnp.zeros((1, HIDDEN), dtype=jnp.float32)   # BatchNorm1d default bias
    w2 = jax.random.normal(k3, (HIDDEN, NUM_CLASSES), dtype=jnp.float32) * 0.05
    b2 = jax.random.normal(k4, (1, NUM_CLASSES), dtype=jnp.float32) * 0.05

    # One-time prep (persistent device arrays), then the per-call hot path.
    w1_bf16, params_slab, w2_pad = prepare_omni_params(w1, b1, gamma, beta, w2, b2)
    out = jax.block_until_ready(omni_classifier_apply(x, w1_bf16, params_slab, w2_pad))

    ref = reference(x, w1, b1, gamma, beta, w2, b2)
    assert out.shape == (B, NUM_CLASSES)
    # Exact softmax reciprocal -> rows sum to 1 up to f32 rounding.
    assert jnp.allclose(jnp.sum(out, axis=1), 1.0, atol=1e-4)
    # bf16 MXU operands => relaxed elementwise tolerances vs the f32 reference.
    assert jnp.allclose(out, ref, atol=5e-3, rtol=5e-2)

    print("KERNEL_OK")
</pallas_src>

<mosaic_0001>
module attributes {stable_mosaic.version = 11 : i64} {
  func.func @omni_classifier_kernel(%arg0: memref<8x576xf32, #tpu.memory_space<vmem>>, %arg1: memref<576x256xbf16, #tpu.memory_space<vmem>>, %arg2: memref<4x256xf32, #tpu.memory_space<vmem>>, %arg3: memref<256x128xbf16, #tpu.memory_space<vmem>>, %arg4: memref<8x128xf32, #tpu.memory_space<vmem>>) attributes {dimension_semantics = [], scalar_prefetch = 0 : i64, scratch_operands = 0 : i64, tpu.core_type = #tpu.core_type<tc>} {
    %c0 = arith.constant 0 : index
    %c0_0 = arith.constant 0 : index
    %0 = vector.load %arg2[%c0, %c0_0] : memref<4x256xf32, #tpu.memory_space<vmem>>, vector<4x256xf32>
    %1 = vector.extract_strided_slice %0 {offsets = [0, 0], sizes = [1, 256], strides = [1, 1]} : vector<4x256xf32> to vector<1x256xf32>
    %2 = vector.extract_strided_slice %0 {offsets = [1, 0], sizes = [1, 256], strides = [1, 1]} : vector<4x256xf32> to vector<1x256xf32>
    %3 = vector.extract_strided_slice %0 {offsets = [2, 0], sizes = [1, 256], strides = [1, 1]} : vector<4x256xf32> to vector<1x256xf32>
    %4 = vector.extract_strided_slice %0 {offsets = [3, 0], sizes = [1, 128], strides = [1, 1]} : vector<4x256xf32> to vector<1x128xf32>
    %c0_1 = arith.constant 0 : index
    %c0_2 = arith.constant 0 : index
    %5 = vector.load %arg0[%c0_1, %c0_2] : memref<8x576xf32, #tpu.memory_space<vmem>>, vector<8x576xf32>
    %6 = arith.truncf %5 : vector<8x576xf32> to vector<8x576xbf16>
    %c0_3 = arith.constant 0 : index
    %c0_4 = arith.constant 0 : index
    %7 = vector.load %arg1[%c0_3, %c0_4] : memref<576x256xbf16, #tpu.memory_space<vmem>>, vector<576x256xbf16>
    %cst = arith.constant dense<0.000000e+00> : vector<8x256xf32>
    %8 = tpu.matmul %6, %7, %cst {dimension_numbers = #tpu.dot_dimension_numbers<[1], [0], [0], [1], [0, 0, 1, 1], [], []>} : vector<8x576xbf16>, vector<576x256xbf16>, vector<8x256xf32> -> vector<8x256xf32>
    %9 = vector.broadcast %1 : vector<1x256xf32> to vector<8x256xf32>
    %10 = arith.addf %8, %9 : vector<8x256xf32>
    %cst_5 = arith.constant dense<0.000000e+00> : vector<256xf32>
    %11 = vector.multi_reduction <add>, %10, %cst_5 [0] : vector<8x256xf32> to vector<256xf32>
    %12 = vector.shape_cast %11 : vector<256xf32> to vector<1x256xf32>
    %cst_6 = arith.constant 8.000000e+00 : f32
    %13 = vector.broadcast %cst_6 : f32 to vector<1x256xf32>
    %14 = arith.divf %12, %13 : vector<1x256xf32>
    %15 = vector.broadcast %14 : vector<1x256xf32> to vector<8x256xf32>
    %16 = arith.subf %10, %15 : vector<8x256xf32>
    %17 = arith.mulf %16, %16 : vector<8x256xf32>
    %cst_7 = arith.constant dense<0.000000e+00> : vector<256xf32>
    %18 = vector.multi_reduction <add>, %17, %cst_7 [0] : vector<8x256xf32> to vector<256xf32>
    %19 = vector.shape_cast %18 : vector<256xf32> to vector<1x256xf32>
    %cst_8 = arith.constant 8.000000e+00 : f32
    %20 = vector.broadcast %cst_8 : f32 to vector<1x256xf32>
    %21 = arith.divf %19, %20 : vector<1x256xf32>
    %cst_9 = arith.constant 9.99999974E-6 : f32
    %22 = vector.broadcast %cst_9 : f32 to vector<1x256xf32>
    %23 = arith.addf %21, %22 : vector<1x256xf32>
    %24 = math.rsqrt %23 : vector<1x256xf32>
    %25 = arith.mulf %2, %24 : vector<1x256xf32>
    %26 = vector.broadcast %25 : vector<1x256xf32> to vector<8x256xf32>
    %27 = arith.mulf %16, %26 : vector<8x256xf32>
    %28 = vector.broadcast %3 : vector<1x256xf32> to vector<8x256xf32>
    %29 = arith.addf %27, %28 : vector<8x256xf32>
    %cst_10 = arith.constant 0.000000e+00 : f32
    %30 = vector.broadcast %cst_10 : f32 to vector<8x256xf32>
    %31 = arith.maximumf %29, %30 : vector<8x256xf32>
    %32 = arith.truncf %31 : vector<8x256xf32> to vector<8x256xbf16>
    %c0_11 = arith.constant 0 : index
    %c0_12 = arith.constant 0 : index
    %33 = vector.load %arg3[%c0_11, %c0_12] : memref<256x128xbf16, #tpu.memory_space<vmem>>, vector<256x128xbf16>
    %cst_13 = arith.constant dense<0.000000e+00> : vector<8x128xf32>
    %34 = tpu.matmul %32, %33, %cst_13 {dimension_numbers = #tpu.dot_dimension_numbers<[1], [0], [0], [1], [0, 0, 1, 1], [], []>} : vector<8x256xbf16>, vector<256x128xbf16>, vector<8x128xf32> -> vector<8x128xf32>
    %35 = vector.broadcast %4 : vector<1x128xf32> to vector<8x128xf32>
    %36 = arith.addf %34, %35 : vector<8x128xf32>
    %cst_14 = arith.constant dense<0xFF800000> : vector<8xf32>
    %37 = vector.multi_reduction <maximumf>, %36, %cst_14 [1] : vector<8x128xf32> to vector<8xf32>
    %38 = vector.shape_cast %37 : vector<8xf32> to vector<8x1xf32>
    %39 = vector.broadcast %38 : vector<8x1xf32> to vector<8x128xf32>
    %40 = arith.subf %36, %39 : vector<8x128xf32>
    %41 = math.exp %40 : vector<8x128xf32>
    %cst_15 = arith.constant dense<0.000000e+00> : vector<8xf32>
    %42 = vector.multi_reduction <add>, %41, %cst_15 [1] : vector<8x128xf32> to vector<8xf32>
    %43 = vector.shape_cast %42 : vector<8xf32> to vector<8x1xf32>
    %44 = vector.broadcast %43 : vector<8x1xf32> to vector<8x128xf32>
    %45 = arith.divf %41, %44 : vector<8x128xf32>
    %c0_16 = arith.constant 0 : index
    %c0_17 = arith.constant 0 : index
    %46 = vector.load %arg4[%c0_16, %c0_17] : memref<8x128xf32, #tpu.memory_space<vmem>>, vector<8x128xf32>
    tpu.vector_store %arg4[%c0_16, %c0_17], %45 {strides = array<i32>} : memref<8x128xf32, #tpu.memory_space<vmem>>, vector<8x128xf32>,
    return
  }
}

</mosaic_0001>

<llo_original>
// kernel: omni_classifier_apply.1
$region0: #{omni_classifier_apply.1}
  #allocation0 [shape = 'u32[]', space=smem, size = 0x4, offset = 0x4, fixed_abs, tag = 'smem constant byte address 0x4 - core index']
  #allocation1 [shape = 'u32[144,128]{1,0:T(1,128)}', space=vmem, size = 0x12000, scoped, tag = 'internal scratch']
  %s0 = inlined_call_operand.hbm [shape: f32[8,576], index: 0, kind: input, shape index: {}]
  %s1 = inlined_call_operand.hbm [shape: bf16[576,256], index: 1, kind: input, shape index: {}]
  %s2 = inlined_call_operand.hbm [shape: f32[4,256], index: 2, kind: input, shape index: {}]
  %s3 = inlined_call_operand.hbm [shape: bf16[256,128], index: 3, kind: input, shape index: {}]
  %s4 = inlined_call_operand.hbm [shape: f32[8,128], index: 4, kind: output, shape index: {}]
  %s5 = sld [smem:[#allocation0]]
  $region42: #{omni_classifier_apply.1} parent=0
    _
  %s7 = ssub.s32 1, %s5
  %s8 = scalar_select 0, %s7, %s5
  $region1: #{omni_classifier_apply.1} parent=0
    #allocation2 [shape = 'u8[20480]{0}', space=vmem, size = 0x5000, scoped, tag = 'input window, operand 0, single buffered']
    #allocation3 [shape = 's32[1]{0}', space=sflag, size = 0x4, scoped, tag = 'scoped memory for omni_classifier_apply.1']
    #allocation4 [shape = 's32[1]{0}', space=sflag, size = 0x4, scoped, tag = 'scoped memory for omni_classifier_apply.1']
    #allocation5 [shape = 'u8[294912]{0}', space=vmem, size = 0x48000, scoped, tag = 'input window, operand 1, single buffered']
    #allocation6 [shape = 's32[1]{0}', space=sflag, size = 0x4, scoped, tag = 'scoped memory for omni_classifier_apply.1']
    #allocation7 [shape = 'u8[4096]{0}', space=vmem, size = 0x1000, scoped, tag = 'input window, operand 2, single buffered']
    #allocation8 [shape = 'u8[65536]{0}', space=vmem, size = 0x10000, scoped, tag = 'input window, operand 3, single buffered']
    #allocation9 [shape = 's32[1]{0}', space=sflag, size = 0x4, scoped, tag = 'scoped memory for omni_classifier_apply.1']
    #allocation10 [shape = 'u8[4096]{0}', space=vmem, size = 0x1000, scoped, tag = 'output window, operand 0, single buffered']
    %9 = vsyncpa [#allocation3], 0
    %10 = vsyncpa [#allocation6], 0
    %11 = vsyncpa [#allocation9], 0
    %12 = vsyncpa [#allocation4], 0
    // Predicated region
    $region2: #{omni_classifier_apply.1} parent=1 // pred_check
      _
    $region3: #{omni_classifier_apply.1} parent=1 // pred_check_branch
      %14 = sbr.rel (0) target = $region5
    $region4: #{omni_classifier_apply.1} parent=1 // pred_region
      %s16 = ssub.s32 640, 640
      %17 = vsyncadd [#allocation3], %s16
      %s19 = sshll.u32 [#allocation2], 4
      %s20 = int_to_ptr.vmem [resolvable:$true] %s19
      %22 = dma.hbm_to_vmem [thread:$0]  %s0, 640, %s20, [#allocation3]
    $region5: #{omni_classifier_apply.1} parent=1 // pred_fallthru
      _
    // Predicated region
    $region6: #{omni_classifier_apply.1} parent=1 // pred_check
      _
    $region7: #{omni_classifier_apply.1} parent=1 // pred_check_branch
      %24 = sbr.rel (0) target = $region9
    $region8: #{omni_classifier_apply.1} parent=1 // pred_region
      %s26 = ssub.s32 9216, 9216
      %27 = vsyncadd [#allocation6], %s26
      %s28 = sshll.u32 [#allocation5], 4
      %s29 = int_to_ptr.vmem [resolvable:$true] %s28
      %34 = dma.hbm_to_vmem [thread:$0]  %s1, 9216, %s29, [#allocation6], 128, 128, 8
    $region9: #{omni_classifier_apply.1} parent=1 // pred_fallthru
      _
    // Predicated region
    $region10: #{omni_classifier_apply.1} parent=1 // pred_check
      _
    $region11: #{omni_classifier_apply.1} parent=1 // pred_check_branch
      %36 = sbr.rel (0) target = $region13
    $region12: #{omni_classifier_apply.1} parent=1 // pred_region
      %s38 = ssub.s32 128, 128
      %39 = vsyncadd [#allocation6], %s38
      %s41 = sshll.u32 [#allocation7], 4
      %s42 = int_to_ptr.vmem [resolvable:$true] %s41
      %44 = dma.hbm_to_vmem [thread:$0]  %s2, 128, %s42, [#allocation6]
    $region13: #{omni_classifier_apply.1} parent=1 // pred_fallthru
      _
    // Predicated region
    $region14: #{omni_classifier_apply.1} parent=1 // pred_check
      _
    $region15: #{omni_classifier_apply.1} parent=1 // pred_check_branch
      %46 = sbr.rel (0) target = $region17
    $region16: #{omni_classifier_apply.1} parent=1 // pred_region
      %s48 = ssub.s32 2048, 2048
      %49 = vsyncadd [#allocation9], %s48
      %s50 = sshll.u32 [#allocation8], 4
      %s51 = int_to_ptr.vmem [resolvable:$true] %s50
      %56 = dma.hbm_to_vmem [thread:$0]  %s3, 2048, %s51, [#allocation9], 64, 64, 4
    $region17: #{omni_classifier_apply.1} parent=1 // pred_fallthru
      _
    // Predicated region
    $region18: #{omni_classifier_apply.1} parent=1 // pred_check
      _
    $region19: #{omni_classifier_apply.1} parent=1 // pred_check_branch
      %58 = sbr.rel (0) target = $region21
    $region20: #{omni_classifier_apply.1} parent=1 // pred_region
      %59 = dma.done [#allocation3], 640
    $region21: #{omni_classifier_apply.1} parent=1 // pred_fallthru
      _
    // Predicated region
    $region22: #{omni_classifier_apply.1} parent=1 // pred_check
      _
    $region23: #{omni_classifier_apply.1} parent=1 // pred_check_branch
      %61 = sbr.rel (0) target = $region25
    $region24: #{omni_classifier_apply.1} parent=1 // pred_region
      %62 = dma.done [#allocation6], 9216
    $region25: #{omni_classifier_apply.1} parent=1 // pred_fallthru
      _
    // Predicated region
    $region26: #{omni_classifier_apply.1} parent=1 // pred_check
      _
    $region27: #{omni_classifier_apply.1} parent=1 // pred_check_branch
      %64 = sbr.rel (0) target = $region29
    $region28: #{omni_classifier_apply.1} parent=1 // pred_region
      %65 = dma.done [#allocation6], 128
    $region29: #{omni_classifier_apply.1} parent=1 // pred_fallthru
      _
    // Predicated region
    $region30: #{omni_classifier_apply.1} parent=1 // pred_check
      _
    $region31: #{omni_classifier_apply.1} parent=1 // pred_check_branch
      %67 = sbr.rel (0) target = $region33
    $region32: #{omni_classifier_apply.1} parent=1 // pred_region
      %68 = dma.done [#allocation9], 2048
    $region33: #{omni_classifier_apply.1} parent=1 // pred_fallthru
      _
    %v70 = vld [vmem:[#allocation7] sm:$0xff]
    %v71 = vld [vmem:[#allocation2] sm:$0xff]
    %v72 = vld [vmem:[#allocation2 + $0x8] sm:$0xff]
    %v73 = vld [vmem:[#allocation2 + $0x10] sm:$0xff]
    %v74 = vld [vmem:[#allocation2 + $0x18] sm:$0xff]
    %v75 = vld [vmem:[#allocation2 + $0x20] sm:$0xff]
    %v76 = vpack.c.bf16 %v71, %v71
    %v77 = vpack.c.bf16 %v72, %v72
    %v78 = vpack.c.bf16 %v73, %v73
    %v79 = vpack.c.bf16 %v74, %v74
    %v80 = vpack.c.bf16 %v75, %v75
    %v81 = vld [vmem:[#allocation5] sm:$0xff]
    %v82 = vld [vmem:[#allocation5 + $0x8] sm:$0xff]
    %v83 = vld [vmem:[#allocation5 + $0x10] sm:$0xff]
    %v84 = vld [vmem:[#allocation5 + $0x18] sm:$0xff]
    %v85 = vld [vmem:[#allocation5 + $0x20] sm:$0xff]
    %v86 = vld [vmem:[#allocation5 + $0x28] sm:$0xff]
    %v87 = vld [vmem:[#allocation5 + $0x30] sm:$0xff]
    %v88 = vld [vmem:[#allocation5 + $0x38] sm:$0xff]
    %v89 = vld [vmem:[#allocation5 + $0x40] sm:$0xff]
    %v90 = vld [vmem:[#allocation5 + $0x48] sm:$0xff]
    %v91 = vld [vmem:[#allocation5 + $0x50] sm:$0xff]
    %v92 = vld [vmem:[#allocation5 + $0x58] sm:$0xff]
    %v93 = vld [vmem:[#allocation5 + $0x60] sm:$0xff]
    %v94 = vld [vmem:[#allocation5 + $0x68] sm:$0xff]
    %v95 = vld [vmem:[#allocation5 + $0x70] sm:$0xff]
    %v96 = vld [vmem:[#allocation5 + $0x78] sm:$0xff]
    %v97 = vld [vmem:[#allocation5 + $0x80] sm:$0xff]
    %v98 = vld [vmem:[#allocation5 + $0x88] sm:$0xff]
    %v99 = vld [vmem:[#allocation5 + $0x90] sm:$0xff]
    %v100 = vld [vmem:[#allocation5 + $0x98] sm:$0xff]
    %v101 = vld [vmem:[#allocation5 + $0xa0] sm:$0xff]
    %v102 = vld [vmem:[#allocation5 + $0xa8] sm:$0xff]
    %v103 = vld [vmem:[#allocation5 + $0xb0] sm:$0xff]
    %v104 = vld [vmem:[#allocation5 + $0xb8] sm:$0xff]
    %v105 = vld [vmem:[#allocation5 + $0xc0] sm:$0xff]
    %v106 = vld [vmem:[#allocation5 + $0xc8] sm:$0xff]
    %v107 = vld [vmem:[#allocation5 + $0xd0] sm:$0xff]
    %v108 = vld [vmem:[#allocation5 + $0xd8] sm:$0xff]
    %v109 = vld [vmem:[#allocation5 + $0xe0] sm:$0xff]
    %v110 = vld [vmem:[#allocation5 + $0xe8] sm:$0xff]
    %v111 = vld [vmem:[#allocation5 + $0xf0] sm:$0xff]
    %v112 = vld [vmem:[#allocation5 + $0xf8] sm:$0xff]
    %v113 = vld [vmem:[#allocation5 + $0x100] sm:$0xff]
    %v114 = vld [vmem:[#allocation5 + $0x108] sm:$0xff]
    %v115 = vld [vmem:[#allocation5 + $0x110] sm:$0xff]
    %v116 = vld [vmem:[#allocation5 + $0x118] sm:$0xff]
    %v117 = vld [vmem:[#allocation5 + $0x120] sm:$0xff]
    %v118 = vld [vmem:[#allocation5 + $0x128] sm:$0xff]
    %v119 = vld [vmem:[#allocation5 + $0x130] sm:$0xff]
    %v120 = vld [vmem:[#allocation5 + $0x138] sm:$0xff]
    %v121 = vld [vmem:[#allocation5 + $0x140] sm:$0xff]
    %v122 = vld [vmem:[#allocation5 + $0x148] sm:$0xff]
    %v123 = vld [vmem:[#allocation5 + $0x150] sm:$0xff]
    %v124 = vld [vmem:[#allocation5 + $0x158] sm:$0xff]
    %v125 = vld [vmem:[#allocation5 + $0x160] sm:$0xff]
    %v126 = vld [vmem:[#allocation5 + $0x168] sm:$0xff]
    %v127 = vld [vmem:[#allocation5 + $0x170] sm:$0xff]
    %v128 = vld [vmem:[#allocation5 + $0x178] sm:$0xff]
    %v129 = vld [vmem:[#allocation5 + $0x180] sm:$0xff]
    %v130 = vld [vmem:[#allocation5 + $0x188] sm:$0xff]
    %v131 = vld [vmem:[#allocation5 + $0x190] sm:$0xff]
    %v132 = vld [vmem:[#allocation5 + $0x198] sm:$0xff]
    %v133 = vld [vmem:[#allocation5 + $0x1a0] sm:$0xff]
    %v134 = vld [vmem:[#allocation5 + $0x1a8] sm:$0xff]
    %v135 = vld [vmem:[#allocation5 + $0x1b0] sm:$0xff]
    %v136 = vld [vmem:[#allocation5 + $0x1b8] sm:$0xff]
    %v137 = vld [vmem:[#allocation5 + $0x1c0] sm:$0xff]
    %v138 = vld [vmem:[#allocation5 + $0x1c8] sm:$0xff]
    %v139 = vld [vmem:[#allocation5 + $0x1d0] sm:$0xff]
    %v140 = vld [vmem:[#allocation5 + $0x1d8] sm:$0xff]
    %v141 = vld [vmem:[#allocation5 + $0x1e0] sm:$0xff]
    %v142 = vld [vmem:[#allocation5 + $0x1e8] sm:$0xff]
    %v143 = vld [vmem:[#allocation5 + $0x1f0] sm:$0xff]
    %v144 = vld [vmem:[#allocation5 + $0x1f8] sm:$0xff]
    %v145 = vld [vmem:[#allocation5 + $0x200] sm:$0xff]
    %v146 = vld [vmem:[#allocation5 + $0x208] sm:$0xff]
    %v147 = vld [vmem:[#allocation5 + $0x210] sm:$0xff]
    %v148 = vld [vmem:[#allocation5 + $0x218] sm:$0xff]
    %v149 = vld [vmem:[#allocation5 + $0x220] sm:$0xff]
    %v150 = vld [vmem:[#allocation5 + $0x228] sm:$0xff]
    %v151 = vld [vmem:[#allocation5 + $0x230] sm:$0xff]
    %v152 = vld [vmem:[#allocation5 + $0x238] sm:$0xff]
    %v154 = vlaneseq
    %v155 = vshrl.u32 %v154, 7
    %v156 = vsub.s32 0, %v155
    %v157 = vrot.slane %v70, %v156
    %v158 = vlaneseq
    %v159 = vshrl.u32 %v158, 7
    %v160 = vsub.s32 4, %v159
    %v161 = vrot.slane %v70, %v160
    %v164 = vlaneseq
    %v165 = vshrl.u32 %v164, 7
    %v166 = vsub.s32 0, %v165
    %v167 = vrot.slane %v157, %v166
    %v168 = vlaneseq
    %v169 = vshrl.u32 %v168, 7
    %v170 = vsub.s32 0, %v169
    %v171 = vrot.slane %v161, %v170
    %v244 = vunpack.c.l.b16 %v81
    %v245 = vunpack.c.h.b16 %v81
    %v246 = vunpack.c.l.b16 %v82
    %v247 = vunpack.c.h.b16 %v82
    %v248 = vunpack.c.l.b16 %v83
    %v249 = vunpack.c.h.b16 %v83
    %v250 = vunpack.c.l.b16 %v84
    %v251 = vunpack.c.h.b16 %v84
    %v252 = vunpack.c.l.b16 %v85
    %v253 = vunpack.c.h.b16 %v85
    %v254 = vunpack.c.l.b16 %v86
    %v255 = vunpack.c.h.b16 %v86
    %v256 = vunpack.c.l.b16 %v87
    %v257 = vunpack.c.h.b16 %v87
    %v258 = vunpack.c.l.b16 %v88
    %v259 = vunpack.c.h.b16 %v88
    %v260 = vunpack.c.l.b16 %v89
    %v261 = vunpack.c.h.b16 %v89
    %v262 = vunpack.c.l.b16 %v90
    %v263 = vunpack.c.h.b16 %v90
    %v264 = vunpack.c.l.b16 %v91
    %v265 = vunpack.c.h.b16 %v91
    %v266 = vunpack.c.l.b16 %v92
    %v267 = vunpack.c.h.b16 %v92
    %v268 = vunpack.c.l.b16 %v93
    %v269 = vunpack.c.h.b16 %v93
    %v270 = vunpack.c.l.b16 %v94
    %v271 = vunpack.c.h.b16 %v94
    %v272 = vunpack.c.l.b16 %v95
    %v273 = vunpack.c.h.b16 %v95
    %v274 = vunpack.c.l.b16 %v96
    %v275 = vunpack.c.h.b16 %v96
    %v276 = vunpack.c.l.b16 %v97
    %v277 = vunpack.c.h.b16 %v97
    %v278 = vunpack.c.l.b16 %v98
    %v279 = vunpack.c.h.b16 %v98
    %v280 = vunpack.c.l.b16 %v99
    %v281 = vunpack.c.h.b16 %v99
    %v282 = vunpack.c.l.b16 %v100
    %v283 = vunpack.c.h.b16 %v100
    %v284 = vunpack.c.l.b16 %v101
    %v285 = vunpack.c.h.b16 %v101
    %v286 = vunpack.c.l.b16 %v102
    %v287 = vunpack.c.h.b16 %v102
    %v288 = vunpack.c.l.b16 %v103
    %v289 = vunpack.c.h.b16 %v103
    %v290 = vunpack.c.l.b16 %v104
    %v291 = vunpack.c.h.b16 %v104
    %v292 = vunpack.c.l.b16 %v105
    %v293 = vunpack.c.h.b16 %v105
    %v294 = vunpack.c.l.b16 %v106
    %v295 = vunpack.c.h.b16 %v106
    %v296 = vunpack.c.l.b16 %v107
    %v297 = vunpack.c.h.b16 %v107
    %v298 = vunpack.c.l.b16 %v108
    %v299 = vunpack.c.h.b16 %v108
    %v300 = vunpack.c.l.b16 %v109
    %v301 = vunpack.c.h.b16 %v109
    %v302 = vunpack.c.l.b16 %v110
    %v303 = vunpack.c.h.b16 %v110
    %v304 = vunpack.c.l.b16 %v111
    %v305 = vunpack.c.h.b16 %v111
    %v306 = vunpack.c.l.b16 %v112
    %v307 = vunpack.c.h.b16 %v112
    %v308 = vunpack.c.l.b16 %v113
    %v309 = vunpack.c.h.b16 %v113
    %v310 = vunpack.c.l.b16 %v114
    %v311 = vunpack.c.h.b16 %v114
    %v312 = vunpack.c.l.b16 %v115
    %v313 = vunpack.c.h.b16 %v115
    %v314 = vunpack.c.l.b16 %v116
    %v315 = vunpack.c.h.b16 %v116
    %v316 = vunpack.c.l.b16 %v117
    %v317 = vunpack.c.h.b16 %v117
    %v318 = vunpack.c.l.b16 %v118
    %v319 = vunpack.c.h.b16 %v118
    %v320 = vunpack.c.l.b16 %v119
    %v321 = vunpack.c.h.b16 %v119
    %v322 = vunpack.c.l.b16 %v120
    %v323 = vunpack.c.h.b16 %v120
    %v324 = vunpack.c.l.b16 %v121
    %v325 = vunpack.c.h.b16 %v121
    %v326 = vunpack.c.l.b16 %v122
    %v327 = vunpack.c.h.b16 %v122
    %v328 = vunpack.c.l.b16 %v123
    %v329 = vunpack.c.h.b16 %v123
    %v330 = vunpack.c.l.b16 %v124
    %v331 = vunpack.c.h.b16 %v124
    %v332 = vunpack.c.l.b16 %v125
    %v333 = vunpack.c.h.b16 %v125
    %v334 = vunpack.c.l.b16 %v126
    %v335 = vunpack.c.h.b16 %v126
    %v336 = vunpack.c.l.b16 %v127
    %v337 = vunpack.c.h.b16 %v127
    %v338 = vunpack.c.l.b16 %v128
    %v339 = vunpack.c.h.b16 %v128
    %v340 = vunpack.c.l.b16 %v129
    %v341 = vunpack.c.h.b16 %v129
    %v342 = vunpack.c.l.b16 %v130
    %v343 = vunpack.c.h.b16 %v130
    %v344 = vunpack.c.l.b16 %v131
    %v345 = vunpack.c.h.b16 %v131
    %v346 = vunpack.c.l.b16 %v132
    %v347 = vunpack.c.h.b16 %v132
    %v348 = vunpack.c.l.b16 %v133
    %v349 = vunpack.c.h.b16 %v133
    %v350 = vunpack.c.l.b16 %v134
    %v351 = vunpack.c.h.b16 %v134
    %v352 = vunpack.c.l.b16 %v135
    %v353 = vunpack.c.h.b16 %v135
    %v354 = vunpack.c.l.b16 %v136
    %v355 = vunpack.c.h.b16 %v136
    %v356 = vunpack.c.l.b16 %v137
    %v357 = vunpack.c.h.b16 %v137
    %v358 = vunpack.c.l.b16 %v138
    %v359 = vunpack.c.h.b16 %v138
    %v360 = vunpack.c.l.b16 %v139
    %v361 = vunpack.c.h.b16 %v139
    %v362 = vunpack.c.l.b16 %v140
    %v363 = vunpack.c.h.b16 %v140
    %v364 = vunpack.c.l.b16 %v141
    %v365 = vunpack.c.h.b16 %v141
    %v366 = vunpack.c.l.b16 %v142
    %v367 = vunpack.c.h.b16 %v142
    %v368 = vunpack.c.l.b16 %v143
    %v369 = vunpack.c.h.b16 %v143
    %v370 = vunpack.c.l.b16 %v144
    %v371 = vunpack.c.h.b16 %v144
    %v372 = vunpack.c.l.b16 %v145
    %v373 = vunpack.c.h.b16 %v145
    %v374 = vunpack.c.l.b16 %v146
    %v375 = vunpack.c.h.b16 %v146
    %v376 = vunpack.c.l.b16 %v147
    %v377 = vunpack.c.h.b16 %v147
    %v378 = vunpack.c.l.b16 %v148
    %v379 = vunpack.c.h.b16 %v148
    %v380 = vunpack.c.l.b16 %v149
    %v381 = vunpack.c.h.b16 %v149
    %v382 = vunpack.c.l.b16 %v150
    %v383 = vunpack.c.h.b16 %v150
    %v384 = vunpack.c.l.b16 %v151
    %v385 = vunpack.c.h.b16 %v151
    %v386 = vunpack.c.l.b16 %v152
    %v387 = vunpack.c.h.b16 %v152
    %v388 = vpack.c.b16 %v246, %v244
    %v389 = vpack.c.b16 %v247, %v245
    %v390 = vpack.c.b16 %v250, %v248
    %v391 = vpack.c.b16 %v251, %v249
    %v392 = vpack.c.b16 %v254, %v252
    %v393 = vpack.c.b16 %v255, %v253
    %v394 = vpack.c.b16 %v258, %v256
    %v395 = vpack.c.b16 %v259, %v257
    %v396 = vpack.c.b16 %v262, %v260
    %v397 = vpack.c.b16 %v263, %v261
    %v398 = vpack.c.b16 %v266, %v264
    %v399 = vpack.c.b16 %v267, %v265
    %v400 = vpack.c.b16 %v270, %v268
    %v401 = vpack.c.b16 %v271, %v269
    %v402 = vpack.c.b16 %v274, %v272
    %v403 = vpack.c.b16 %v275, %v273
    %v404 = vpack.c.b16 %v278, %v276
    %v405 = vpack.c.b16 %v279, %v277
    %v406 = vpack.c.b16 %v282, %v280
    %v407 = vpack.c.b16 %v283, %v281
    %v408 = vpack.c.b16 %v286, %v284
    %v409 = vpack.c.b16 %v287, %v285
    %v410 = vpack.c.b16 %v290, %v288
    %v411 = vpack.c.b16 %v291, %v289
    %v412 = vpack.c.b16 %v294, %v292
    %v413 = vpack.c.b16 %v295, %v293
    %v414 = vpack.c.b16 %v298, %v296
    %v415 = vpack.c.b16 %v299, %v297
    %v416 = vpack.c.b16 %v302, %v300
    %v417 = vpack.c.b16 %v303, %v301
    %v418 = vpack.c.b16 %v306, %v304
    %v419 = vpack.c.b16 %v307, %v305
    %v420 = vpack.c.b16 %v310, %v308
    %v421 = vpack.c.b16 %v311, %v309
    %v422 = vpack.c.b16 %v314, %v312
    %v423 = vpack.c.b16 %v315, %v313
    %v424 = vpack.c.b16 %v318, %v316
    %v425 = vpack.c.b16 %v319, %v317
    %v426 = vpack.c.b16 %v322, %v320
    %v427 = vpack.c.b16 %v323, %v321
    %v428 = vpack.c.b16 %v326, %v324
    %v429 = vpack.c.b16 %v327, %v325
    %v430 = vpack.c.b16 %v330, %v328
    %v431 = vpack.c.b16 %v331, %v329
    %v432 = vpack.c.b16 %v334, %v332
    %v433 = vpack.c.b16 %v335, %v333
    %v434 = vpack.c.b16 %v338, %v336
    %v435 = vpack.c.b16 %v339, %v337
    %v436 = vpack.c.b16 %v342, %v340
    %v437 = vpack.c.b16 %v343, %v341
    %v438 = vpack.c.b16 %v346, %v344
    %v439 = vpack.c.b16 %v347, %v345
    %v440 = vpack.c.b16 %v350, %v348
    %v441 = vpack.c.b16 %v351, %v349
    %v442 = vpack.c.b16 %v354, %v352
    %v443 = vpack.c.b16 %v355, %v353
    %v444 = vpack.c.b16 %v358, %v356
    %v445 = vpack.c.b16 %v359, %v357
    %v446 = vpack.c.b16 %v362, %v360
    %v447 = vpack.c.b16 %v363, %v361
    %v448 = vpack.c.b16 %v366, %v364
    %v449 = vpack.c.b16 %v367, %v365
    %v450 = vpack.c.b16 %v370, %v368
    %v451 = vpack.c.b16 %v371, %v369
    %v452 = vpack.c.b16 %v374, %v372
    %v453 = vpack.c.b16 %v375, %v373
    %v454 = vpack.c.b16 %v378, %v376
    %v455 = vpack.c.b16 %v379, %v377
    %v456 = vpack.c.b16 %v382, %v380
    %v457 = vpack.c.b16 %v383, %v381
    %v458 = vpack.c.b16 %v386, %v384
    %v459 = vpack.c.b16 %v387, %v385
    %vm532 = vcmask 523264
    %v534 = vsel %vm532, %v80, 0
    %536 = vmatprep.subr.bf16.mxu0 %v389
    %537 = vmatpush1.bf16.msra.mxu0 %v388
    %538 = vmatprep.subr.bf16.mxu0 %v391
    %539 = vmatpush1.bf16.msra.mxu0 %v390
    %540 = vmatprep.subr.bf16.mxu0 %v393
    %541 = vmatpush1.bf16.msra.mxu0 %v392
    %542 = vmatprep.subr.bf16.mxu0 %v395
    %543 = vmatpush1.bf16.msra.mxu0 %v394
    %544 = vmatprep.subr.bf16.mxu0 %v397
    %545 = vmatpush1.bf16.msra.mxu0 %v396
    %546 = vmatprep.subr.bf16.mxu0 %v399
    %547 = vmatpush1.bf16.msra.mxu0 %v398
    %548 = vmatprep.subr.bf16.mxu0 %v401
    %549 = vmatpush1.bf16.msra.mxu0 %v400
    %550 = vmatprep.subr.bf16.mxu0 %v403
    %551 = vmatpush1.bf16.msra.mxu0 %v402
    %552 = vmatprep.subr.bf16.mxu0 %v405
    %553 = vmatpush1.bf16.msra.mxu0 %v404
    %554 = vmatprep.subr.bf16.mxu0 %v407
    %555 = vmatpush1.bf16.msra.mxu0 %v406
    %556 = vmatprep.subr.bf16.mxu0 %v409
    %557 = vmatpush1.bf16.msra.mxu0 %v408
    %558 = vmatprep.subr.bf16.mxu0 %v411
    %559 = vmatpush1.bf16.msra.mxu0 %v410
    %560 = vmatprep.subr.bf16.mxu0 %v413
    %561 = vmatpush1.bf16.msra.mxu0 %v412
    %562 = vmatprep.subr.bf16.mxu0 %v415
    %563 = vmatpush1.bf16.msra.mxu0 %v414
    %564 = vmatprep.subr.bf16.mxu0 %v417
    %565 = vmatpush1.bf16.msra.mxu0 %v416
    %566 = vmatprep.subr.bf16.mxu0 %v419
    %567 = vmatpush1.bf16.msra.mxu0 %v418
    %568 = vmatprep.mubr.bf16.mxu0 %v77
    %569 = vmatmul.mubr.bf16.gmra.mrb[0].mxu0 %v76
    %v570 = vpop.f32.mrb[0].mxu0
    %v571 = vadd.f32 %v167, %v570
    %v572 = vpop.f32.mrb[0].mxu0
    %v573 = vadd.f32 %v171, %v572
    %v574 = vpop.f32.mrb[0].mxu0
    %v575 = vpop.f32.mrb[0].mxu0
    %576 = vdwg.mxu0
    %577 = vmatprep.subr.bf16.mxu0 %v421
    %578 = vmatpush1.bf16.msra.mxu0 %v420
    %579 = vmatprep.subr.bf16.mxu0 %v423
    %580 = vmatpush1.bf16.msra.mxu0 %v422
    %581 = vmatprep.subr.bf16.mxu0 %v425
    %582 = vmatpush1.bf16.msra.mxu0 %v424
    %583 = vmatprep.subr.bf16.mxu0 %v427
    %584 = vmatpush1.bf16.msra.mxu0 %v426
    %585 = vmatprep.subr.bf16.mxu0 %v429
    %586 = vmatpush1.bf16.msra.mxu0 %v428
    %587 = vmatprep.subr.bf16.mxu0 %v431
    %588 = vmatpush1.bf16.msra.mxu0 %v430
    %589 = vmatprep.subr.bf16.mxu0 %v433
    %590 = vmatpush1.bf16.msra.mxu0 %v432
    %591 = vmatprep.subr.bf16.mxu0 %v435
    %592 = vmatpush1.bf16.msra.mxu0 %v434
    %593 = vmatprep.subr.bf16.mxu0 %v437
    %594 = vmatpush1.bf16.msra.mxu0 %v436
    %595 = vmatprep.subr.bf16.mxu0 %v439
    %596 = vmatpush1.bf16.msra.mxu0 %v438
    %597 = vmatprep.subr.bf16.mxu0 %v441
    %598 = vmatpush1.bf16.msra.mxu0 %v440
    %599 = vmatprep.subr.bf16.mxu0 %v443
    %600 = vmatpush1.bf16.msra.mxu0 %v442
    %601 = vmatprep.subr.bf16.mxu0 %v445
    %602 = vmatpush1.bf16.msra.mxu0 %v444
    %603 = vmatprep.subr.bf16.mxu0 %v447
    %604 = vmatpush1.bf16.msra.mxu0 %v446
    %605 = vmatprep.subr.bf16.mxu0 %v449
    %606 = vmatpush1.bf16.msra.mxu0 %v448
    %607 = vmatprep.subr.bf16.mxu0 %v451
    %608 = vmatpush1.bf16.msra.mxu0 %v450
    %609 = vmatprep.mubr.bf16.mxu0 %v79
    %610 = vmatmul.mubr.bf16.gmra.mrb[0].mxu0 %v78
    %v611 = vpop.f32.mrb[0].mxu0
    %v612 = vadd.f32 %v571, %v611
    %v613 = vpop.f32.mrb[0].mxu0
    %v614 = vadd.f32 %v573, %v613
    %v615 = vpop.f32.mrb[0].mxu0
    %v616 = vpop.f32.mrb[0].mxu0
    %617 = vdwg.mxu0
    %618 = vmatprep.subr.bf16.mxu0 %v453
    %619 = vmatpush1.bf16.msra.mxu0 %v452
    %620 = vmatprep.subr.bf16.mxu0 %v455
    %621 = vmatpush1.bf16.msra.mxu0 %v454
    %622 = vmatprep.subr.bf16.mxu0 %v457
    %623 = vmatpush1.bf16.msra.mxu0 %v456
    %624 = vmatprep.subr.bf16.mxu0 %v459
    %625 = vmatpush1.bf16.msra.mxu0 %v458
    %626 = vmatprep.subr.bf16.mxu0 0
    %627 = vmatpush1.bf16.msra.mxu0 0
    %628 = vmatprep.subr.bf16.mxu0 0
    %629 = vmatpush1.bf16.msra.mxu0 0
    %630 = vmatprep.subr.bf16.mxu0 0
    %631 = vmatpush1.bf16.msra.mxu0 0
    %632 = vmatprep.subr.bf16.mxu0 0
    %633 = vmatpush1.bf16.msra.mxu0 0
    %634 = vmatprep.subr.bf16.mxu0 0
    %635 = vmatpush1.bf16.msra.mxu0 0
    %636 = vmatprep.subr.bf16.mxu0 0
    %637 = vmatpush1.bf16.msra.mxu0 0
    %638 = vmatprep.subr.bf16.mxu0 0
    %639 = vmatpush1.bf16.msra.mxu0 0
    %640 = vmatprep.subr.bf16.mxu0 0
    %641 = vmatpush1.bf16.msra.mxu0 0
    %642 = vmatprep.subr.bf16.mxu0 0
    %643 = vmatpush1.bf16.msra.mxu0 0
    %644 = vmatprep.subr.bf16.mxu0 0
    %645 = vmatpush1.bf16.msra.mxu0 0
    %646 = vmatprep.subr.bf16.mxu0 0
    %647 = vmatpush1.bf16.msra.mxu0 0
    %648 = vmatprep.subr.bf16.mxu0 0
    %649 = vmatpush1.bf16.msra.mxu0 0
    %650 = vmatprep.mubr.bf16.mxu0 0
    %651 = vmatmul.mubr.bf16.gmra.mrb[0].mxu0 %v534
    %v652 = vpop.f32.mrb[0].mxu0
    %v653 = vadd.f32 %v612, %v652
    %v654 = vpop.f32.mrb[0].mxu0
    %v655 = vadd.f32 %v614, %v654
    %v656 = vpop.f32.mrb[0].mxu0
    %v657 = vpop.f32.mrb[0].mxu0
    %658 = vdwg.mxu0
    %v659 = vrot.slane %v653, 4
    %v660 = vadd.f32 %v653, %v659
    %v661 = vrot.slane %v660, 2
    %v662 = vadd.f32 %v660, %v661
    %v663 = vrot.slane %v662, 1
    %v664 = vadd.f32 %v662, %v663
    %v665 = vrot.slane %v655, 4
    %v666 = vadd.f32 %v655, %v665
    %v667 = vrot.slane %v666, 2
    %v668 = vadd.f32 %v666, %v667
    %v669 = vrot.slane %v668, 1
    %v670 = vadd.f32 %v668, %v669
    %v671 = vrcp.pop 8.0
    %v672 = vmul.f32 %v664, %v671
    %v673 = vmul.f32 %v670, %v671
    %v674 = vsub.f32 %v653, %v672
    %v675 = vsub.f32 %v655, %v673
    %v676 = vmul.f32 %v674, %v674
    %v677 = vmul.f32 %v675, %v675
    %v678 = vrot.slane %v676, 4
    %v679 = vadd.f32 %v676, %v678
    %v680 = vrot.slane %v679, 2
    %v681 = vadd.f32 %v679, %v680
    %v682 = vrot.slane %v681, 1
    %v683 = vadd.f32 %v681, %v682
    %v684 = vrot.slane %v677, 4
    %v685 = vadd.f32 %v677, %v684
    %v686 = vrot.slane %v685, 2
    %v687 = vadd.f32 %v685, %v686
    %v688 = vrot.slane %v687, 1
    %v689 = vadd.f32 %v687, %v688
    %v690 = vmul.f32 %v683, %v671
    %v691 = vmul.f32 %v689, %v671
    %v692 = vadd.f32 %v690, 1e-05
    %v693 = vadd.f32 %v691, 1e-05
    %v694 = vrsqrt.pop %v692
    %v695 = vrsqrt.pop %v693
    %v698 = vcombine.low %v694, %v695
    %v699 = vrot.slane %v698, 7
    %v701 = vmul.f32 %v70, %v699
    %v703 = vlaneseq
    %v704 = vshrl.u32 %v703, 7
    %v705 = vsub.s32 1, %v704
    %v706 = vrot.slane %v701, %v705
    %v707 = vlaneseq
    %v708 = vshrl.u32 %v707, 7
    %v709 = vsub.s32 5, %v708
    %v710 = vrot.slane %v701, %v709
    %v713 = vlaneseq
    %v714 = vshrl.u32 %v713, 7
    %v715 = vsub.s32 1, %v714
    %v716 = vrot.slane %v706, %v715
    %v717 = vlaneseq
    %v718 = vshrl.u32 %v717, 7
    %v719 = vsub.s32 1, %v718
    %v720 = vrot.slane %v710, %v719
    %v721 = vmul.f32 %v674, %v716
    %v722 = vmul.f32 %v675, %v720
    %v723 = vlaneseq
    %v724 = vshrl.u32 %v723, 7
    %v725 = vsub.s32 2, %v724
    %v726 = vrot.slane %v70, %v725
    %v727 = vlaneseq
    %v728 = vshrl.u32 %v727, 7
    %v729 = vsub.s32 6, %v728
    %v730 = vrot.slane %v70, %v729
    %v733 = vlaneseq
    %v734 = vshrl.u32 %v733, 7
    %v735 = vsub.s32 2, %v734
    %v736 = vrot.slane %v726, %v735
    %v737 = vlaneseq
    %v738 = vshrl.u32 %v737, 7
    %v739 = vsub.s32 2, %v738
    %v740 = vrot.slane %v730, %v739
    %v741 = vadd.f32 %v721, %v736
    %v742 = vadd.f32 %v722, %v740
    %v743 = vmax.f32 %v741, 0.0
    %v744 = vmax.f32 %v742, 0.0
    %v745 = vpack.c.bf16 %v743, %v743
    %v746 = vpack.c.bf16 %v744, %v744
    %v747 = vld [vmem:[#allocation8] sm:$0xf]
    %v748 = vld [vmem:[#allocation8 + $0x4] sm:$0xf]
    %v749 = vld [vmem:[#allocation8 + $0x8] sm:$0xf]
    %v750 = vld [vmem:[#allocation8 + $0xc] sm:$0xf]
    %v751 = vld [vmem:[#allocation8 + $0x10] sm:$0xf]
    %v752 = vld [vmem:[#allocation8 + $0x14] sm:$0xf]
    %v753 = vld [vmem:[#allocation8 + $0x18] sm:$0xf]
    %v754 = vld [vmem:[#allocation8 + $0x1c] sm:$0xf]
    %v755 = vld [vmem:[#allocation8 + $0x20] sm:$0xf]
    %v756 = vld [vmem:[#allocation8 + $0x24] sm:$0xf]
    %v757 = vld [vmem:[#allocation8 + $0x28] sm:$0xf]
    %v758 = vld [vmem:[#allocation8 + $0x2c] sm:$0xf]
    %v759 = vld [vmem:[#allocation8 + $0x30] sm:$0xf]
    %v760 = vld [vmem:[#allocation8 + $0x34] sm:$0xf]
    %v761 = vld [vmem:[#allocation8 + $0x38] sm:$0xf]
    %v762 = vld [vmem:[#allocation8 + $0x3c] sm:$0xf]
    %v763 = vld [vmem:[#allocation8 + $0x40] sm:$0xf]
    %v764 = vld [vmem:[#allocation8 + $0x44] sm:$0xf]
    %v765 = vld [vmem:[#allocation8 + $0x48] sm:$0xf]
    %v766 = vld [vmem:[#allocation8 + $0x4c] sm:$0xf]
    %v767 = vld [vmem:[#allocation8 + $0x50] sm:$0xf]
    %v768 = vld [vmem:[#allocation8 + $0x54] sm:$0xf]
    %v769 = vld [vmem:[#allocation8 + $0x58] sm:$0xf]
    %v770 = vld [vmem:[#allocation8 + $0x5c] sm:$0xf]
    %v771 = vld [vmem:[#allocation8 + $0x60] sm:$0xf]
    %v772 = vld [vmem:[#allocation8 + $0x64] sm:$0xf]
    %v773 = vld [vmem:[#allocation8 + $0x68] sm:$0xf]
    %v774 = vld [vmem:[#allocation8 + $0x6c] sm:$0xf]
    %v775 = vld [vmem:[#allocation8 + $0x70] sm:$0xf]
    %v776 = vld [vmem:[#allocation8 + $0x74] sm:$0xf]
    %v777 = vld [vmem:[#allocation8 + $0x78] sm:$0xf]
    %v778 = vld [vmem:[#allocation8 + $0x7c] sm:$0xf]
    %v779 = vlaneseq
    %v780 = vshrl.u32 %v779, 7
    %v781 = vsub.s32 3, %v780
    %v782 = vrot.slane %v70, %v781
    %v815 = vunpack.c.l.b16 %v747
    %v816 = vunpack.c.l.b16 %v748
    %v817 = vunpack.c.l.b16 %v749
    %v818 = vunpack.c.l.b16 %v750
    %v819 = vunpack.c.l.b16 %v751
    %v820 = vunpack.c.l.b16 %v752
    %v821 = vunpack.c.l.b16 %v753
    %v822 = vunpack.c.l.b16 %v754
    %v823 = vunpack.c.l.b16 %v755
    %v824 = vunpack.c.l.b16 %v756
    %v825 = vunpack.c.l.b16 %v757
    %v826 = vunpack.c.l.b16 %v758
    %v827 = vunpack.c.l.b16 %v759
    %v828 = vunpack.c.l.b16 %v760
    %v829 = vunpack.c.l.b16 %v761
    %v830 = vunpack.c.l.b16 %v762
    %v831 = vunpack.c.l.b16 %v763
    %v832 = vunpack.c.l.b16 %v764
    %v833 = vunpack.c.l.b16 %v765
    %v834 = vunpack.c.l.b16 %v766
    %v835 = vunpack.c.l.b16 %v767
    %v836 = vunpack.c.l.b16 %v768
    %v837 = vunpack.c.l.b16 %v769
    %v838 = vunpack.c.l.b16 %v770
    %v839 = vunpack.c.l.b16 %v771
    %v840 = vunpack.c.l.b16 %v772
    %v841 = vunpack.c.l.b16 %v773
    %v842 = vunpack.c.l.b16 %v774
    %v843 = vunpack.c.l.b16 %v775
    %v844 = vunpack.c.l.b16 %v776
    %v845 = vunpack.c.l.b16 %v777
    %v846 = vunpack.c.l.b16 %v778
    %v847 = vpack.c.b16 %v816, %v815
    %v848 = vpack.c.b16 %v818, %v817
    %v849 = vpack.c.b16 %v820, %v819
    %v850 = vpack.c.b16 %v822, %v821
    %v851 = vpack.c.b16 %v824, %v823
    %v852 = vpack.c.b16 %v826, %v825
    %v853 = vpack.c.b16 %v828, %v827
    %v854 = vpack.c.b16 %v830, %v829
    %v855 = vpack.c.b16 %v832, %v831
    %v856 = vpack.c.b16 %v834, %v833
    %v857 = vpack.c.b16 %v836, %v835
    %v858 = vpack.c.b16 %v838, %v837
    %v859 = vpack.c.b16 %v840, %v839
    %v860 = vpack.c.b16 %v842, %v841
    %v861 = vpack.c.b16 %v844, %v843
    %v862 = vpack.c.b16 %v846, %v845
    %879 = vmatprep.subr.bf16.mxu0 0
    %880 = vmatpush1.bf16.msra.mxu0 %v847
    %881 = vmatprep.subr.bf16.mxu0 0
    %882 = vmatpush1.bf16.msra.mxu0 %v848
    %883 = vmatprep.subr.bf16.mxu0 0
    %884 = vmatpush1.bf16.msra.mxu0 %v849
    %885 = vmatprep.subr.bf16.mxu0 0
    %886 = vmatpush1.bf16.msra.mxu0 %v850
    %887 = vmatprep.subr.bf16.mxu0 0
    %888 = vmatpush1.bf16.msra.mxu0 %v851
    %889 = vmatprep.subr.bf16.mxu0 0
    %890 = vmatpush1.bf16.msra.mxu0 %v852
    %891 = vmatprep.subr.bf16.mxu0 0
    %892 = vmatpush1.bf16.msra.mxu0 %v853
    %893 = vmatprep.subr.bf16.mxu0 0
    %894 = vmatpush1.bf16.msra.mxu0 %v854
    %895 = vmatprep.subr.bf16.mxu0 0
    %896 = vmatpush1.bf16.msra.mxu0 %v855
    %897 = vmatprep.subr.bf16.mxu0 0
    %898 = vmatpush1.bf16.msra.mxu0 %v856
    %899 = vmatprep.subr.bf16.mxu0 0
    %900 = vmatpush1.bf16.msra.mxu0 %v857
    %901 = vmatprep.subr.bf16.mxu0 0
    %902 = vmatpush1.bf16.msra.mxu0 %v858
    %903 = vmatprep.subr.bf16.mxu0 0
    %904 = vmatpush1.bf16.msra.mxu0 %v859
    %905 = vmatprep.subr.bf16.mxu0 0
    %906 = vmatpush1.bf16.msra.mxu0 %v860
    %907 = vmatprep.subr.bf16.mxu0 0
    %908 = vmatpush1.bf16.msra.mxu0 %v861
    %909 = vmatprep.subr.bf16.mxu0 0
    %910 = vmatpush1.bf16.msra.mxu0 %v862
    %911 = vmatprep.mubr.bf16.mxu0 %v746
    %912 = vmatmul.mubr.bf16.gmra.mrb[0].mxu0 %v745
    %v913 = vpop.f32.mrb[0].mxu0
    %v914 = vadd.f32 %v782, %v913
    %v915 = vpop.f32.mrb[0].mxu0
    %v916 = vpop.f32.mrb[0].mxu0
    %v917 = vpop.f32.mrb[0].mxu0
    %918 = vdwg.mxu0
    %919 = vmax.xlane.f32.xlu0 %v914
    %v920 = vpop.xlane.xlu0 %919
    %v921 = vsub.f32 %v914, %v920
    %v922 = vmul.f32 %v921, 1.442695
    %v923 = vpow.pop %v922
    %924 = vadd.xlane.f32.xlu0 %v923
    %v925 = vpop.xlane.xlu0 %924
    %v926 = vrcp.pop %v925
    %v927 = vmul.f32 %v923, %v926
    %928 = vst [vmem:[#allocation10] sm:$0xff] %v927
    // Predicated region
    $region34: #{omni_classifier_apply.1} parent=1 // pred_check
      _
    $region35: #{omni_classifier_apply.1} parent=1 // pred_check_branch
      %930 = sbr.rel (0) target = $region37
    $region36: #{omni_classifier_apply.1} parent=1 // pred_region
      %s932 = ssub.s32 128, 128
      %933 = vsyncadd [#allocation4], %s932
      %s935 = sshll.u32 [#allocation10], 4
      %s936 = int_to_ptr.vmem [resolvable:$true] %s935
      %938 = dma.vmem_to_hbm [thread:$0]  %s936, 128, %s4, [#allocation4]
    $region37: #{omni_classifier_apply.1} parent=1 // pred_fallthru
      _
    // Predicated region
    $region38: #{omni_classifier_apply.1} parent=1 // pred_check
      _
    $region39: #{omni_classifier_apply.1} parent=1 // pred_check_branch
      %940 = sbr.rel (0) target = $region41
    $region40: #{omni_classifier_apply.1} parent=1 // pred_region
      %941 = dma.done [#allocation4], 128
    $region41: #{omni_classifier_apply.1} parent=1 // pred_fallthru
      _
    %942 = vsyncpa [#allocation3], 1
    %943 = vsyncpa [#allocation6], 1
    %944 = vsyncpa [#allocation9], 1
    %945 = vsyncpa [#allocation4], 1

</llo_original>
